<compile_context>
chip_gen: v6e
topology: v6e:2x2x1
jax: 0.10.0
libtpu: 0.0.40
codegen_flags: <defaults>
</compile_context>

<pallas_src>
import math
import functools

import jax
import jax.numpy as jnp
from jax import lax
from jax.experimental import pallas as pl
from jax.experimental.pallas import tpu as pltpu

# contract last dim of lhs with last dim of rhs  ==  lhs @ rhs.T, no transpose
_CONTRACT_LAST = (((1,), (1,)), ((), ()))


def _kv_proj_kernel(x_ref, wk_ref, wv_ref, k_ref, v_ref, *, dim: int):
    """One grid step == one (batch, row_tile) cell.

    x_ref:   (1, TP, dim) bf16
    wk/wv:   (dim, dim)   bf16  PyTorch (out, in) layout, grid-invariant blocks
    k_ref:   (1, TP, dim) bf16  = (x @ Wk.T) / sqrt(dim)
    v_ref:   (1, TP, dim) bf16  =  x @ Wv.T
    """
    x = x_ref[0]                                                   # (TP, dim)
    xk = lax.dot_general(x, wk_ref[...], _CONTRACT_LAST,
                         preferred_element_type=jnp.float32)       # (TP, dim)
    xv = lax.dot_general(x, wv_ref[...], _CONTRACT_LAST,
                         preferred_element_type=jnp.float32)       # (TP, dim)
    # Fold 1/sqrt(dim) into K (slen*dim elems) instead of scores (slen*slen).
    k_ref[0] = (xk * (1.0 / math.sqrt(dim))).astype(k_ref.dtype)
    v_ref[0] = xv.astype(v_ref.dtype)


def _flash_attn_kernel(xq_ref, k_ref, v_ref, wo_ref, mask_ref, o_ref,
                       m_ref, l_ref, acc_ref):
    """One grid step == one (batch, q_tile, kv_tile) cell.

    xq_ref:  (1, TQ, dim) bf16  query rows (Wq = identity)
    k_ref:   (1, TK, dim) bf16  pre-projected, pre-scaled K tile
    v_ref:   (1, TK, dim) bf16  pre-projected V tile
    wo_ref:  (dim, dim)   bf16  output projection, grid-invariant block
    mask_ref:(TQ, TK)     bf16  additive mask tile (upcast to f32 in-kernel)
    o_ref:   (1, TQ, dim) bf16  resident across the kv axis
    m/l/acc: VMEM scratch f32   online-softmax state
    """
    ki = pl.program_id(2)

    @pl.when(ki == 0)
    def _():
        m_ref[...] = jnp.full_like(m_ref, -jnp.inf)
        l_ref[...] = jnp.zeros_like(l_ref)
        acc_ref[...] = jnp.zeros_like(acc_ref)

    xq = xq_ref[0]                                                 # (TQ, dim)
    k = k_ref[0]                                                   # (TK, dim)
    v = v_ref[0]                                                   # (TK, dim)

    # scores = (xq @ K^T)  (K already carries 1/sqrt(dim)); mask add in f32.
    s = lax.dot_general(xq, k, _CONTRACT_LAST,
                        preferred_element_type=jnp.float32)        # (TQ, TK)
    s = s + mask_ref[...].astype(jnp.float32)

    # Online softmax update (all f32 on the VPU/EUP).
    m_prev = m_ref[...]
    m_new = jnp.maximum(m_prev, jnp.max(s, axis=-1, keepdims=True))
    alpha = jnp.exp(m_prev - m_new)
    p = jnp.exp(s - m_new)

    l_ref[...] = alpha * l_ref[...] + jnp.sum(p, axis=-1, keepdims=True)
    acc_ref[...] = alpha * acc_ref[...] + jnp.dot(
        p.astype(jnp.bfloat16), v, preferred_element_type=jnp.float32)
    m_ref[...] = m_new

    @pl.when(ki == pl.num_programs(2) - 1)
    def _():
        h = acc_ref[...] * pl.reciprocal(l_ref[...], approx=True)  # (TQ, dim)
        out = lax.dot_general(h.astype(jnp.bfloat16), wo_ref[...],
                              _CONTRACT_LAST,
                              preferred_element_type=jnp.float32)
        o_ref[0] = out.astype(o_ref.dtype)


def bayesian_attention(x, wk, wv, wo, mask, *, tq=256, tk=256, tp=256):
    """BayesianAttention forward.

    x: (bs, slen, dim) f32/bf16; wk/wv/wo: (dim, dim) in PyTorch (out, in)
    layout; mask: (slen, slen) additive mask broadcast over batch.
    Returns (bs, slen, dim) bf16.
    """
    bs, slen, dim = x.shape
    tq = min(tq, slen)
    tk = min(tk, slen)
    tp = min(tp, slen)
    assert slen % tq == 0 and slen % tk == 0 and slen % tp == 0, \
        "slen must divide the tiles"

    # MXU operands and mask in bf16 (halves DMA / VMEM footprint).
    x_bf = x.astype(jnp.bfloat16)
    wk_bf = wk.astype(jnp.bfloat16)
    wv_bf = wv.astype(jnp.bfloat16)
    wo_bf = wo.astype(jnp.bfloat16)
    mask_bf = mask.astype(jnp.bfloat16)

    # --- Kernel 1: K/V projections, computed once per row (not per q tile). --
    k_scaled, v_proj = pl.pallas_call(
        functools.partial(_kv_proj_kernel, dim=dim),
        out_shape=(jax.ShapeDtypeStruct((bs, slen, dim), jnp.bfloat16),
                   jax.ShapeDtypeStruct((bs, slen, dim), jnp.bfloat16)),
        grid_spec=pltpu.PrefetchScalarGridSpec(
            num_scalar_prefetch=0,
            grid=(bs, slen // tp),
            in_specs=[
                pl.BlockSpec((1, tp, dim), lambda b, i: (b, i, 0)),   # x rows
                pl.BlockSpec((dim, dim), lambda b, i: (0, 0)),        # Wk
                pl.BlockSpec((dim, dim), lambda b, i: (0, 0)),        # Wv
            ],
            out_specs=[
                pl.BlockSpec((1, tp, dim), lambda b, i: (b, i, 0)),   # K/sqrt(d)
                pl.BlockSpec((1, tp, dim), lambda b, i: (b, i, 0)),   # V
            ],
        ),
        compiler_params=pltpu.CompilerParams(
            dimension_semantics=("parallel", "parallel")),
    )(x_bf, wk_bf, wv_bf)

    # --- Kernel 2: flash attention + output projection. ----------------------
    grid = (bs, slen // tq, slen // tk)
    out = pl.pallas_call(
        _flash_attn_kernel,
        out_shape=jax.ShapeDtypeStruct((bs, slen, dim), jnp.bfloat16),
        grid_spec=pltpu.PrefetchScalarGridSpec(
            num_scalar_prefetch=0,
            grid=grid,
            in_specs=[
                pl.BlockSpec((1, tq, dim), lambda b, qi, ki: (b, qi, 0)),  # xq
                pl.BlockSpec((1, tk, dim), lambda b, qi, ki: (b, ki, 0)),  # K
                pl.BlockSpec((1, tk, dim), lambda b, qi, ki: (b, ki, 0)),  # V
                pl.BlockSpec((dim, dim), lambda b, qi, ki: (0, 0)),        # Wo
                pl.BlockSpec((tq, tk), lambda b, qi, ki: (qi, ki)),        # mask
            ],
            out_specs=pl.BlockSpec((1, tq, dim), lambda b, qi, ki: (b, qi, 0)),
            scratch_shapes=[
                pltpu.VMEM((tq, 1), jnp.float32),    # running max m
                pltpu.VMEM((tq, 1), jnp.float32),    # running denom l
                pltpu.VMEM((tq, dim), jnp.float32),  # output accumulator
            ],
        ),
        compiler_params=pltpu.CompilerParams(
            dimension_semantics=("parallel", "parallel", "arbitrary")),
    )(x_bf, k_scaled, v_proj, wo_bf, mask_bf)
    return out


def sample_bayes_linear_weight(key, dim):
    """Deterministic synthetic draw of a BayesLinear weight:
    weight = weight_mu + exp(weight_log_sigma) * eps  (reparameterization)."""
    k_mu, k_eps = jax.random.split(key)
    bound = 1.0 / math.sqrt(dim)
    weight_mu = jax.random.uniform(k_mu, (dim, dim), jnp.float32,
                                   minval=-bound, maxval=bound)
    weight_log_sigma = jnp.full((dim, dim), -5.0, jnp.float32)
    eps = jax.random.normal(k_eps, (dim, dim), jnp.float32)
    return weight_mu + jnp.exp(weight_log_sigma) * eps


def reference(x, wk, wv, wo, mask, dim):
    xk = x @ wk.T
    xv = x @ wv.T
    scores = jnp.einsum("bqd,bkd->bqk", x, xk) / math.sqrt(dim)
    scores = scores + mask[None]
    attn = jax.nn.softmax(scores, axis=-1)
    h = jnp.einsum("bqk,bkd->bqd", attn, xv)
    return h @ wo.T


if __name__ == "__main__":
    # Lane-dense small shapes (multiples of (8, 128)) so vregs/MXU stay filled.
    bs, slen, dim = 2, 256, 128

    key = jax.random.PRNGKey(0)
    kx, kk, kv, ko = jax.random.split(key, 4)

    x = jax.random.normal(kx, (bs, slen, dim), jnp.float32)

    wk = sample_bayes_linear_weight(kk, dim)
    wv = sample_bayes_linear_weight(kv, dim)
    wo = sample_bayes_linear_weight(ko, dim)

    # Causal additive mask (slen, slen), broadcast over batch.
    causal = jnp.tril(jnp.ones((slen, slen), jnp.float32))
    mask = jnp.where(causal > 0, 0.0, -1e9).astype(jnp.float32)

    out = bayesian_attention(x, wk, wv, wo, mask)
    out = jax.block_until_ready(out)

    # Reference in f32 using the same bf16-rounded operands the kernel sees.
    def bf(a):
        return a.astype(jnp.bfloat16).astype(jnp.float32)
    ref = reference(bf(x), bf(wk), bf(wv), bf(wo), bf(mask), dim)

    assert out.shape == (bs, slen, dim)
    assert jnp.allclose(out.astype(jnp.float32), ref,
                        atol=2e-2, rtol=2e-2), "mismatch vs reference"

    print("KERNEL_OK")
</pallas_src>

<mosaic_0001>
module attributes {stable_mosaic.version = 11 : i64} {
  func.func @_kv_proj_kernel(%arg0: i32, %arg1: i32, %arg2: memref<1x256x128xbf16, #tpu.memory_space<vmem>>, %arg3: memref<128x128xbf16, #tpu.memory_space<vmem>>, %arg4: memref<128x128xbf16, #tpu.memory_space<vmem>>, %arg5: memref<1x256x128xbf16, #tpu.memory_space<vmem>>, %arg6: memref<1x256x128xbf16, #tpu.memory_space<vmem>>) attributes {dimension_semantics = [#tpu.dimension_semantics<parallel>, #tpu.dimension_semantics<parallel>], iteration_bounds = array<i64: 2, 1>, scalar_prefetch = 0 : i64, scratch_operands = 0 : i64, tpu.core_type = #tpu.core_type<tc>, window_params = [{transform_indices = @transform_0, window_bounds = array<i64: 1, 256, 128>}, {pipeline_mode = #tpu.pipeline_mode<synchronous>, transform_indices = @transform_1, window_bounds = array<i64: 128, 128>}, {pipeline_mode = #tpu.pipeline_mode<synchronous>, transform_indices = @transform_2, window_bounds = array<i64: 128, 128>}, {transform_indices = @transform_3, window_bounds = array<i64: 1, 256, 128>}, {transform_indices = @transform_4, window_bounds = array<i64: 1, 256, 128>}]} {
    %c0 = arith.constant 0 : index
    %c0_0 = arith.constant 0 : index
    %c0_1 = arith.constant 0 : index
    %0 = vector.load %arg2[%c0, %c0_0, %c0_1] : memref<1x256x128xbf16, #tpu.memory_space<vmem>>, vector<1x256x128xbf16>
    %1 = vector.shape_cast %0 : vector<1x256x128xbf16> to vector<256x128xbf16>
    %c0_2 = arith.constant 0 : index
    %c0_3 = arith.constant 0 : index
    %2 = vector.load %arg3[%c0_2, %c0_3] : memref<128x128xbf16, #tpu.memory_space<vmem>>, vector<128x128xbf16>
    %cst = arith.constant dense<0.000000e+00> : vector<256x128xf32>
    %3 = tpu.matmul %1, %2, %cst {dimension_numbers = #tpu.dot_dimension_numbers<[1], [1], [0], [0], [0, 0, 1, 0], [], []>} : vector<256x128xbf16>, vector<128x128xbf16>, vector<256x128xf32> -> vector<256x128xf32>
    %c0_4 = arith.constant 0 : index
    %c0_5 = arith.constant 0 : index
    %4 = vector.load %arg4[%c0_4, %c0_5] : memref<128x128xbf16, #tpu.memory_space<vmem>>, vector<128x128xbf16>
    %cst_6 = arith.constant dense<0.000000e+00> : vector<256x128xf32>
    %5 = tpu.matmul %1, %4, %cst_6 {dimension_numbers = #tpu.dot_dimension_numbers<[1], [1], [0], [0], [0, 0, 1, 0], [], []>} : vector<256x128xbf16>, vector<128x128xbf16>, vector<256x128xf32> -> vector<256x128xf32>
    %cst_7 = arith.constant 0.0883883461 : f32
    %6 = vector.broadcast %cst_7 : f32 to vector<256x128xf32>
    %7 = arith.mulf %3, %6 : vector<256x128xf32>
    %8 = arith.truncf %7 : vector<256x128xf32> to vector<256x128xbf16>
    %c0_8 = arith.constant 0 : index
    %c0_9 = arith.constant 0 : index
    %c0_10 = arith.constant 0 : index
    %9 = vector.load %arg5[%c0_8, %c0_9, %c0_10] : memref<1x256x128xbf16, #tpu.memory_space<vmem>>, vector<1x256x128xbf16>
    %10 = vector.shape_cast %9 : vector<1x256x128xbf16> to vector<256x128xbf16>
    %11 = vector.shape_cast %8 : vector<256x128xbf16> to vector<1x256x128xbf16>
    tpu.vector_store %arg5[%c0_8, %c0_9, %c0_10], %11 {strides = array<i32>} : memref<1x256x128xbf16, #tpu.memory_space<vmem>>, vector<1x256x128xbf16>,
    %12 = arith.truncf %5 : vector<256x128xf32> to vector<256x128xbf16>
    %c0_11 = arith.constant 0 : index
    %c0_12 = arith.constant 0 : index
    %c0_13 = arith.constant 0 : index
    %13 = vector.load %arg6[%c0_11, %c0_12, %c0_13] : memref<1x256x128xbf16, #tpu.memory_space<vmem>>, vector<1x256x128xbf16>
    %14 = vector.shape_cast %13 : vector<1x256x128xbf16> to vector<256x128xbf16>
    %15 = vector.shape_cast %12 : vector<256x128xbf16> to vector<1x256x128xbf16>
    tpu.vector_store %arg6[%c0_11, %c0_12, %c0_13], %15 {strides = array<i32>} : memref<1x256x128xbf16, #tpu.memory_space<vmem>>, vector<1x256x128xbf16>,
    return
  }
  func.func @transform_0(%arg0: i32, %arg1: i32) -> (i32, i32, i32) {
    %c0_i32 = arith.constant 0 : i32
    %c0_i32_0 = arith.constant 0 : i32
    return %arg0, %arg1, %c0_i32 : i32, i32, i32
  }
  func.func @transform_1(%arg0: i32, %arg1: i32) -> (i32, i32) {
    %c0_i32 = arith.constant 0 : i32
    %c0_i32_0 = arith.constant 0 : i32
    %c0_i32_1 = arith.constant 0 : i32
    return %c0_i32, %c0_i32_0 : i32, i32
  }
  func.func @transform_2(%arg0: i32, %arg1: i32) -> (i32, i32) {
    %c0_i32 = arith.constant 0 : i32
    %c0_i32_0 = arith.constant 0 : i32
    %c0_i32_1 = arith.constant 0 : i32
    return %c0_i32, %c0_i32_0 : i32, i32
  }
  func.func @transform_3(%arg0: i32, %arg1: i32) -> (i32, i32, i32) {
    %c0_i32 = arith.constant 0 : i32
    %c0_i32_0 = arith.constant 0 : i32
    return %arg0, %arg1, %c0_i32 : i32, i32, i32
  }
  func.func @transform_4(%arg0: i32, %arg1: i32) -> (i32, i32, i32) {
    %c0_i32 = arith.constant 0 : i32
    %c0_i32_0 = arith.constant 0 : i32
    return %arg0, %arg1, %c0_i32 : i32, i32, i32
  }
}

</mosaic_0001>

<llo_original>
// kernel: tpu_custom_call.1
$region0: #{tpu_custom_call.1}
  #allocation0 [shape = 'u32[]', space=smem, size = 0x4, offset = 0x4, fixed_abs, tag = 'smem constant byte address 0x4 - core index']
  #allocation1 [shape = 'u32[144,128]{1,0:T(1,128)}', space=vmem, size = 0x12000, scoped, tag = 'internal scratch']
  %s0 = inlined_call_operand.hbm [shape: bf16[2,256,128], index: 0, kind: input, shape index: {}]
  %s1 = inlined_call_operand.hbm [shape: bf16[128,128], index: 1, kind: input, shape index: {}]
  %s2 = inlined_call_operand.hbm [shape: bf16[128,128], index: 2, kind: input, shape index: {}]
  %s3 = inlined_call_operand.hbm [shape: bf16[2,256,128], index: 3, kind: output, shape index: {0}]
  %s4 = inlined_call_operand.hbm [shape: bf16[2,256,128], index: 4, kind: output, shape index: {1}]
  %5 = xla_tuple %s3, %s4
  %s6 = sld [smem:[#allocation0]]
  $region65: #{tpu_custom_call.1} parent=0
    _
  %s8 = ssub.s32 1, %s6
  %s9 = scalar_select 0, %s8, %s6
  $region1: #{tpu_custom_call.1} parent=0
    #allocation2 [shape = 'u8[131072]{0}', space=vmem, size = 0x20000, scoped, tag = 'input window, operand 0']
    #allocation3 [shape = 's32[2]{0}', space=sflag, size = 0x8, scoped, tag = 'scoped memory for tpu_custom_call.1']
    #allocation4 [shape = 's32[2]{0}', space=sflag, size = 0x8, scoped, tag = 'scoped memory for tpu_custom_call.1']
    #allocation5 [shape = 'u8[32768]{0}', space=vmem, size = 0x8000, scoped, tag = 'input window, operand 1, single buffered']
    #allocation6 [shape = 's32[1]{0}', space=sflag, size = 0x4, scoped, tag = 'scoped memory for tpu_custom_call.1']
    #allocation7 [shape = 'u8[32768]{0}', space=vmem, size = 0x8000, scoped, tag = 'input window, operand 2, single buffered']
    #allocation8 [shape = 'u8[131072]{0}', space=vmem, size = 0x20000, scoped, tag = 'output window, operand 0']
    #allocation9 [shape = 'u8[131072]{0}', space=vmem, size = 0x20000, scoped, tag = 'output window, operand 1']
    #allocation10 [shape = 's32[2]{0}', space=sflag, size = 0x8, scoped, tag = 'scoped memory for tpu_custom_call.1']
    %10 = vsyncpa [#allocation3], 0
    %s11 = scalar_lea.sflag [#allocation3], 1
    %12 = vsyncpa %s11, 0
    %13 = vsyncpa [#allocation6], 0
    %14 = vsyncpa [#allocation4], 0
    %s15 = scalar_lea.sflag [#allocation4], 1
    %16 = vsyncpa %s15, 0
    %17 = vsyncpa [#allocation10], 0
    %s18 = scalar_lea.sflag [#allocation10], 1
    %19 = vsyncpa %s18, 0
    loop: start=0, step=1, limit=4
    $region2: #{tpu_custom_call.1} parent=1 // loop_pre_header
      _
    $region3: #{tpu_custom_call.1} parent=1 // loop_header
      %s21 = sphi 0, %s25
      %p22 = scmp.ge.s32.totalorder %s21, 4
      %s28 = sphi 0, %s40
      %s29 = sphi 0, %s36
      %s30 = sphi 0, %s28
      %s31 = sphi 0, %s29
      %s32 = sphi 0, %s30
      %s33 = sphi 0, %s31
      %s45 = sphi 0, %s47
      %s48 = sphi 0, %s45
      %s49 = sphi 0, %s48
      %s65 = sphi 0, %s49
      %s69 = sphi 0, %s69
      %s71 = sphi 0, %s69
      %s72 = sphi 0, %s71
      %s86 = sphi 0, %s72
      %s90 = sphi 0, %s90
      %s92 = sphi 0, %s90
      %s93 = sphi 0, %s92
      %s107 = sphi 0, %s93
      %s115 = sphi 0, %s117
      %s118 = sphi 0, %s115
      %s119 = sphi 0, %s118
      %s135 = sphi 0, %s119
      %s143 = sphi 0, %s145
      %s146 = sphi 0, %s143
      %s147 = sphi 0, %s146
      %s163 = sphi 0, %s147
    $region4: #{tpu_custom_call.1} parent=1 // loop_header_branch
      %24 = sbr.rel (%p22) target = $region8
    $region5: #{tpu_custom_call.1} parent=1 // loop_body
      %s26 = ssub.s32 %s21, 1
      %s27 = ssub.s32 %s21, 2
      %s34 = sadd.s32 1, %s29
      %p35 = scmp.ge.s32.totalorder %s34, 1
      %s36 = scalar_select %p35, 0, %s34
      %s37 = sadd.s32 1, %s28
      %s38 = scalar_select %p35, %s37, %s28
      %p39 = scmp.ge.s32.totalorder %s38, 2
      %s40 = scalar_select %p39, 0, %s38
      %s41 = ssub.s32 %s28, %s40
      %s42 = ssub.s32 %s29, %s36
      %s43 = sor.u32 %s41, %s42
      %p44 = scmp.eq.s32.totalorder %s43, 0
      %s46 = sadd.s32 %s45, 1
      %s47 = scalar_select %p44, %s45, %s46
      %p50 = pneg %p44
      %p51 = scmp.eq.s32.totalorder %s21, 1
      %p52 = por %p50, %p51
      %p53 = scmp.ne.s32.totalorder %s45, %s48
      %p54 = scmp.eq.s32.totalorder %s21, 0
      %p55 = por %p53, %p54
      %p56 = scmp.ne.s32.totalorder %s45, %s48
      %p57 = scmp.eq.s32.totalorder %s26, 1
      %p58 = por %p56, %p57
      %p59 = scmp.ne.s32.totalorder %s48, %s49
      %p60 = scmp.eq.s32.totalorder %s26, 0
      %p61 = por %p59, %p60
      %p62 = scmp.ne.s32.totalorder %s48, %s49
      %p63 = scmp.eq.s32.totalorder %s27, 1
      %p64 = por %p62, %p63
      %p66 = scmp.ne.s32.totalorder %s49, %s65
      %p67 = scmp.eq.s32.totalorder %s27, 0
      %p68 = por %p66, %p67
      %s70 = sadd.s32 %s69, 1
      %p73 = scmp.eq.s32.totalorder %s21, 1
      %p74 = scmp.ne.s32.totalorder %s69, %s71
      %p75 = scmp.eq.s32.totalorder %s21, 0
      %p76 = por %p74, %p75
      %p77 = scmp.ne.s32.totalorder %s69, %s71
      %p78 = scmp.eq.s32.totalorder %s26, 1
      %p79 = por %p77, %p78
      %p80 = scmp.ne.s32.totalorder %s71, %s72
      %p81 = scmp.eq.s32.totalorder %s26, 0
      %p82 = por %p80, %p81
      %p83 = scmp.ne.s32.totalorder %s71, %s72
      %p84 = scmp.eq.s32.totalorder %s27, 1
      %p85 = por %p83, %p84
      %p87 = scmp.ne.s32.totalorder %s72, %s86
      %p88 = scmp.eq.s32.totalorder %s27, 0
      %p89 = por %p87, %p88
      %s91 = sadd.s32 %s90, 1
      %p94 = scmp.eq.s32.totalorder %s21, 1
      %p95 = scmp.ne.s32.totalorder %s90, %s92
      %p96 = scmp.eq.s32.totalorder %s21, 0
      %p97 = por %p95, %p96
      %p98 = scmp.ne.s32.totalorder %s90, %s92
      %p99 = scmp.eq.s32.totalorder %s26, 1
      %p100 = por %p98, %p99
      %p101 = scmp.ne.s32.totalorder %s92, %s93
      %p102 = scmp.eq.s32.totalorder %s26, 0
      %p103 = por %p101, %p102
      %p104 = scmp.ne.s32.totalorder %s92, %s93
      %p105 = scmp.eq.s32.totalorder %s27, 1
      %p106 = por %p104, %p105
      %p108 = scmp.ne.s32.totalorder %s93, %s107
      %p109 = scmp.eq.s32.totalorder %s27, 0
      %p110 = por %p108, %p109
      %s111 = ssub.s32 %s28, %s40
      %s112 = ssub.s32 %s29, %s36
      %s113 = sor.u32 %s111, %s112
      %p114 = scmp.eq.s32.totalorder %s113, 0
      %s116 = sadd.s32 %s115, 1
      %s117 = scalar_select %p114, %s115, %s116
      %p120 = pneg %p114
      %p121 = scmp.eq.s32.totalorder %s21, 1
      %p122 = por %p120, %p121
      %p123 = scmp.ne.s32.totalorder %s115, %s118
      %p124 = scmp.eq.s32.totalorder %s21, 0
      %p125 = por %p123, %p124
      %p126 = scmp.ne.s32.totalorder %s115, %s118
      %p127 = scmp.eq.s32.totalorder %s26, 1
      %p128 = por %p126, %p127
      %p129 = scmp.ne.s32.totalorder %s118, %s119
      %p130 = scmp.eq.s32.totalorder %s26, 0
      %p131 = por %p129, %p130
      %p132 = scmp.ne.s32.totalorder %s118, %s119
      %p133 = scmp.eq.s32.totalorder %s27, 1
      %p134 = por %p132, %p133
      %p136 = scmp.ne.s32.totalorder %s119, %s135
      %p137 = scmp.eq.s32.totalorder %s27, 0
      %p138 = por %p136, %p137
      %s139 = ssub.s32 %s28, %s40
      %s140 = ssub.s32 %s29, %s36
      %s141 = sor.u32 %s139, %s140
      %p142 = scmp.eq.s32.totalorder %s141, 0
      %s144 = sadd.s32 %s143, 1
      %s145 = scalar_select %p142, %s143, %s144
      %p148 = pneg %p142
      %p149 = scmp.eq.s32.totalorder %s21, 1
      %p150 = por %p148, %p149
      %p151 = scmp.ne.s32.totalorder %s143, %s146
      %p152 = scmp.eq.s32.totalorder %s21, 0
      %p153 = por %p151, %p152
      %p154 = scmp.ne.s32.totalorder %s143, %s146
      %p155 = scmp.eq.s32.totalorder %s26, 1
      %p156 = por %p154, %p155
      %p157 = scmp.ne.s32.totalorder %s146, %s147
      %p158 = scmp.eq.s32.totalorder %s26, 0
      %p159 = por %p157, %p158
      %p160 = scmp.ne.s32.totalorder %s146, %s147
      %p161 = scmp.eq.s32.totalorder %s27, 1
      %p162 = por %p160, %p161
      %p164 = scmp.ne.s32.totalorder %s147, %s163
      %p165 = scmp.eq.s32.totalorder %s27, 0
      %p166 = por %p164, %p165
      %p167 = scmp.le.s32.totalorder 1, %s21
      %p168 = scmp.lt.s32.totalorder %s21, 3
      %p169 = pnand %p167, %p168
      %p170 = pneg %p169
      // Predicated region
      $region9: #{tpu_custom_call.1} parent=5 // pred_check
        _
      $region10: #{tpu_custom_call.1} parent=5 // pred_check_branch
        %172 = sbr.rel (%p169) target = $region12
      $region11: #{tpu_custom_call.1} parent=5 // pred_region
        %s173 = ssub.s32 %s21, 1
        // Predicated region
        $region13: #{tpu_custom_call.1} parent=11 // pred_check
          %p174 = pneg %p82
        $region14: #{tpu_custom_call.1} parent=11 // pred_check_branch
          %176 = sbr.rel (%p174) target = $region16
        $region15: #{tpu_custom_call.1} parent=11 // pred_region
          %s178 = ssub.s32 1024, 1024
          %179 = vsyncadd [#allocation6], %s178
          %s180 = sshll.u32 [#allocation5], 4
          %s181 = int_to_ptr.vmem [resolvable:$true] %s180
          %186 = dma.hbm_to_vmem [thread:$0]  %s1, 1024, %s181, [#allocation6], 64, 64, 4
        $region16: #{tpu_custom_call.1} parent=11 // pred_fallthru
          _
        // Predicated region
        $region17: #{tpu_custom_call.1} parent=11 // pred_check
          %p187 = pneg %p103
        $region18: #{tpu_custom_call.1} parent=11 // pred_check_branch
          %189 = sbr.rel (%p187) target = $region20
        $region19: #{tpu_custom_call.1} parent=11 // pred_region
          %s191 = ssub.s32 1024, 1024
          %192 = vsyncadd [#allocation6], %s191
          %s193 = sshll.u32 [#allocation7], 4
          %s194 = int_to_ptr.vmem [resolvable:$true] %s193
          %199 = dma.hbm_to_vmem [thread:$0]  %s2, 1024, %s194, [#allocation6], 64, 64, 4
        $region20: #{tpu_custom_call.1} parent=11 // pred_fallthru
          _
      $region12: #{tpu_custom_call.1} parent=5 // pred_fallthru
        _
      %p200 = scmp.lt.s32.totalorder %s21, 2
      // Predicated region
      $region21: #{tpu_custom_call.1} parent=5 // pred_check
        %p201 = pneg %p200
      $region22: #{tpu_custom_call.1} parent=5 // pred_check_branch
        %203 = sbr.rel (%p201) target = $region24
      $region23: #{tpu_custom_call.1} parent=5 // pred_region
        // Predicated region
        $region25: #{tpu_custom_call.1} parent=23 // pred_check
          %p204 = pneg %p55
        $region26: #{tpu_custom_call.1} parent=23 // pred_check_branch
          %206 = sbr.rel (%p204) target = $region28
        $region27: #{tpu_custom_call.1} parent=23 // pred_region
          %s207 = sand.u32 %s45, 1
          %s208 = scalar_lea.sflag [#allocation3], %s207
          %s209 = sand.u32 %s45, 1
          %s210 = smul.addr %s209, 128
          %s211 = scalar_lea.vmem [#allocation2], %s210
          %s212 = smul.u32 32, %s29
          %s214 = ssub.s32 2048, 2048
          %215 = vsyncadd %s208, %s214
          %s216 = smul.addr %s28, 32
          %s217 = sadd.s32 %s212, %s216
          %s218 = smul.addr %s217, 64
          %s219 = scalar_lea.hbm %s0, %s218
          %s220 = sshll.u32 %s211, 4
          %s221 = int_to_ptr.vmem [resolvable:$true] %s220
          %226 = dma.hbm_to_vmem [thread:$0]  %s219, 2048, %s221, %s208, 64, 64, 4
        $region28: #{tpu_custom_call.1} parent=23 // pred_fallthru
          _
      $region24: #{tpu_custom_call.1} parent=5 // pred_fallthru
        _
      %p227 = scmp.le.s32.totalorder 1, %s21
      %p228 = scmp.lt.s32.totalorder %s21, 3
      %p229 = pnand %p227, %p228
      %p230 = pneg %p229
      // Predicated region
      $region29: #{tpu_custom_call.1} parent=5 // pred_check
        _
      $region30: #{tpu_custom_call.1} parent=5 // pred_check_branch
        %232 = sbr.rel (%p229) target = $region32
      $region31: #{tpu_custom_call.1} parent=5 // pred_region
        %s233 = ssub.s32 %s21, 1
        %s234 = sand.u32 %s48, 1
        %s235 = scalar_lea.sflag [#allocation3], %s234
        %s236 = sand.u32 %s48, 1
        %s237 = smul.addr %s236, 128
        %s238 = scalar_lea.vmem [#allocation2], %s237
        // Predicated region
        $region33: #{tpu_custom_call.1} parent=31 // pred_check
          %p239 = pneg %p61
        $region34: #{tpu_custom_call.1} parent=31 // pred_check_branch
          %241 = sbr.rel (%p239) target = $region36
        $region35: #{tpu_custom_call.1} parent=31 // pred_region
          %242 = dma.done %s235, 2048
        $region36: #{tpu_custom_call.1} parent=31 // pred_fallthru
          _
        // Predicated region
        $region37: #{tpu_custom_call.1} parent=31 // pred_check
          %p243 = pneg %p82
        $region38: #{tpu_custom_call.1} parent=31 // pred_check_branch
          %245 = sbr.rel (%p243) target = $region40
        $region39: #{tpu_custom_call.1} parent=31 // pred_region
          %246 = dma.done [#allocation6], 1024
        $region40: #{tpu_custom_call.1} parent=31 // pred_fallthru
          _
        // Predicated region
        $region41: #{tpu_custom_call.1} parent=31 // pred_check
          %p247 = pneg %p103
        $region42: #{tpu_custom_call.1} parent=31 // pred_check_branch
          %249 = sbr.rel (%p247) target = $region44
        $region43: #{tpu_custom_call.1} parent=31 // pred_region
          %250 = dma.done [#allocation6], 1024
        $region44: #{tpu_custom_call.1} parent=31 // pred_fallthru
          _
        %s251 = sand.u32 %s48, 1
        %s252 = scalar_lea.sflag [#allocation3], %s251
        %s253 = sand.u32 %s48, 1
        %s254 = smul.addr %s253, 128
        %s255 = scalar_lea.vmem [#allocation2], %s254
        %p256 = pneg %p61
        %p257 = pneg %p58
        %p258 = pneg %p82
        %p259 = pneg %p79
        %p260 = pneg %p103
        %p261 = pneg %p100
        %p262 = pneg %p131
        %p263 = pneg %p128
        %s264 = sand.u32 %s118, 1
        %s265 = scalar_lea.sflag [#allocation4], %s264
        %s266 = sand.u32 %s118, 1
        %s267 = smul.addr %s266, 128
        %s268 = scalar_lea.vmem [#allocation8], %s267
        %p269 = pneg %p159
        %p270 = pneg %p156
        %s271 = sand.u32 %s146, 1
        %s272 = scalar_lea.sflag [#allocation10], %s271
        %s273 = sand.u32 %s146, 1
        %s274 = smul.addr %s273, 128
        %s275 = scalar_lea.vmem [#allocation9], %s274
        %s276 = smul.u32 32, %s31
        %s277 = smul.u32 32, %s31
        %s278 = smul.u32 32, %s31
        %v280 = vld [vmem:[%s238] sm:$0xf]
        %v281 = vld [vmem:[%s238 + $0x4] sm:$0xf]
        %v282 = vld [vmem:[%s238 + $0x8] sm:$0xf]
        %v283 = vld [vmem:[%s238 + $0xc] sm:$0xf]
        %v284 = vld [vmem:[%s238 + $0x10] sm:$0xf]
        %v285 = vld [vmem:[%s238 + $0x14] sm:$0xf]
        %v286 = vld [vmem:[%s238 + $0x18] sm:$0xf]
        %v287 = vld [vmem:[%s238 + $0x1c] sm:$0xf]
        %v288 = vld [vmem:[%s238 + $0x20] sm:$0xf]
        %v289 = vld [vmem:[%s238 + $0x24] sm:$0xf]
        %v290 = vld [vmem:[%s238 + $0x28] sm:$0xf]
        %v291 = vld [vmem:[%s238 + $0x2c] sm:$0xf]
        %v292 = vld [vmem:[%s238 + $0x30] sm:$0xf]
        %v293 = vld [vmem:[%s238 + $0x34] sm:$0xf]
        %v294 = vld [vmem:[%s238 + $0x38] sm:$0xf]
        %v295 = vld [vmem:[%s238 + $0x3c] sm:$0xf]
        %v296 = vld [vmem:[%s238 + $0x40] sm:$0xf]
        %v297 = vld [vmem:[%s238 + $0x44] sm:$0xf]
        %v298 = vld [vmem:[%s238 + $0x48] sm:$0xf]
        %v299 = vld [vmem:[%s238 + $0x4c] sm:$0xf]
        %v300 = vld [vmem:[%s238 + $0x50] sm:$0xf]
        %v301 = vld [vmem:[%s238 + $0x54] sm:$0xf]
        %v302 = vld [vmem:[%s238 + $0x58] sm:$0xf]
        %v303 = vld [vmem:[%s238 + $0x5c] sm:$0xf]
        %v304 = vld [vmem:[%s238 + $0x60] sm:$0xf]
        %v305 = vld [vmem:[%s238 + $0x64] sm:$0xf]
        %v306 = vld [vmem:[%s238 + $0x68] sm:$0xf]
        %v307 = vld [vmem:[%s238 + $0x6c] sm:$0xf]
        %v308 = vld [vmem:[%s238 + $0x70] sm:$0xf]
        %v309 = vld [vmem:[%s238 + $0x74] sm:$0xf]
        %v310 = vld [vmem:[%s238 + $0x78] sm:$0xf]
        %v311 = vld [vmem:[%s238 + $0x7c] sm:$0xf]
        %v312 = vld [vmem:[#allocation5] sm:$0xf]
        %v313 = vld [vmem:[#allocation5 + $0x4] sm:$0xf]
        %v314 = vld [vmem:[#allocation5 + $0x8] sm:$0xf]
        %v315 = vld [vmem:[#allocation5 + $0xc] sm:$0xf]
        %v316 = vld [vmem:[#allocation5 + $0x10] sm:$0xf]
        %v317 = vld [vmem:[#allocation5 + $0x14] sm:$0xf]
        %v318 = vld [vmem:[#allocation5 + $0x18] sm:$0xf]
        %v319 = vld [vmem:[#allocation5 + $0x1c] sm:$0xf]
        %v320 = vld [vmem:[#allocation5 + $0x20] sm:$0xf]
        %v321 = vld [vmem:[#allocation5 + $0x24] sm:$0xf]
        %v322 = vld [vmem:[#allocation5 + $0x28] sm:$0xf]
        %v323 = vld [vmem:[#allocation5 + $0x2c] sm:$0xf]
        %v324 = vld [vmem:[#allocation5 + $0x30] sm:$0xf]
        %v325 = vld [vmem:[#allocation5 + $0x34] sm:$0xf]
        %v326 = vld [vmem:[#allocation5 + $0x38] sm:$0xf]
        %v327 = vld [vmem:[#allocation5 + $0x3c] sm:$0xf]
        %v360 = vunpack.c.l.b16 %v280
        %v361 = vunpack.c.l.b16 %v281
        %v362 = vunpack.c.l.b16 %v282
        %v363 = vunpack.c.l.b16 %v283
        %v364 = vunpack.c.l.b16 %v284
        %v365 = vunpack.c.l.b16 %v285
        %v366 = vunpack.c.l.b16 %v286
        %v367 = vunpack.c.l.b16 %v287
        %v368 = vunpack.c.l.b16 %v288
        %v369 = vunpack.c.l.b16 %v289
        %v370 = vunpack.c.l.b16 %v290
        %v371 = vunpack.c.l.b16 %v291
        %v372 = vunpack.c.l.b16 %v292
        %v373 = vunpack.c.l.b16 %v293
        %v374 = vunpack.c.l.b16 %v294
        %v375 = vunpack.c.l.b16 %v295
        %v376 = vunpack.c.l.b16 %v296
        %v377 = vunpack.c.l.b16 %v297
        %v378 = vunpack.c.l.b16 %v298
        %v379 = vunpack.c.l.b16 %v299
        %v380 = vunpack.c.l.b16 %v300
        %v381 = vunpack.c.l.b16 %v301
        %v382 = vunpack.c.l.b16 %v302
        %v383 = vunpack.c.l.b16 %v303
        %v384 = vunpack.c.l.b16 %v304
        %v385 = vunpack.c.l.b16 %v305
        %v386 = vunpack.c.l.b16 %v306
        %v387 = vunpack.c.l.b16 %v307
        %v388 = vunpack.c.l.b16 %v308
        %v389 = vunpack.c.l.b16 %v309
        %v390 = vunpack.c.l.b16 %v310
        %v391 = vunpack.c.l.b16 %v311
        %v392 = vpack.c.b16 %v361, %v360
        %v393 = vpack.c.b16 %v363, %v362
        %v394 = vpack.c.b16 %v365, %v364
        %v395 = vpack.c.b16 %v367, %v366
        %v396 = vpack.c.b16 %v369, %v368
        %v397 = vpack.c.b16 %v371, %v370
        %v398 = vpack.c.b16 %v373, %v372
        %v399 = vpack.c.b16 %v375, %v374
        %v400 = vpack.c.b16 %v377, %v376
        %v401 = vpack.c.b16 %v379, %v378
        %v402 = vpack.c.b16 %v381, %v380
        %v403 = vpack.c.b16 %v383, %v382
        %v404 = vpack.c.b16 %v385, %v384
        %v405 = vpack.c.b16 %v387, %v386
        %v406 = vpack.c.b16 %v389, %v388
        %v407 = vpack.c.b16 %v391, %v390
        %v440 = vunpack.c.l.b16 %v312
        %v441 = vunpack.c.l.b16 %v313
        %v442 = vunpack.c.l.b16 %v314
        %v443 = vunpack.c.l.b16 %v315
        %v444 = vunpack.c.l.b16 %v316
        %v445 = vunpack.c.l.b16 %v317
        %v446 = vunpack.c.l.b16 %v318
        %v447 = vunpack.c.l.b16 %v319
        %v448 = vunpack.c.l.b16 %v320
        %v449 = vunpack.c.l.b16 %v321
        %v450 = vunpack.c.l.b16 %v322
        %v451 = vunpack.c.l.b16 %v323
        %v452 = vunpack.c.l.b16 %v324
        %v453 = vunpack.c.l.b16 %v325
        %v454 = vunpack.c.l.b16 %v326
        %v455 = vunpack.c.l.b16 %v327
        %v456 = vpack.c.b16 %v441, %v440
        %v457 = vpack.c.b16 %v443, %v442
        %v458 = vpack.c.b16 %v445, %v444
        %v459 = vpack.c.b16 %v447, %v446
        %v460 = vpack.c.b16 %v449, %v448
        %v461 = vpack.c.b16 %v451, %v450
        %v462 = vpack.c.b16 %v453, %v452
        %v463 = vpack.c.b16 %v455, %v454
        %472 = vmatprep.subr.bf16.mxu0 0
        %473 = vmatpush1.bf16.xpose.msra.mxu0 %v463
        %474 = vmatprep.subr.bf16.mxu0 0
        %475 = vmatpush1.bf16.xpose.msra.mxu0 %v462
        %476 = vmatprep.subr.bf16.mxu0 0
        %477 = vmatpush1.bf16.xpose.msra.mxu0 %v461
        %478 = vmatprep.subr.bf16.mxu0 0
        %479 = vmatpush1.bf16.xpose.msra.mxu0 %v460
        %480 = vmatprep.subr.bf16.mxu0 0
        %481 = vmatpush1.bf16.xpose.msra.mxu0 %v459
        %482 = vmatprep.subr.bf16.mxu0 0
        %483 = vmatpush1.bf16.xpose.msra.mxu0 %v458
        %484 = vmatprep.subr.bf16.mxu0 0
        %485 = vmatpush1.bf16.xpose.msra.mxu0 %v457
        %486 = vmatprep.subr.bf16.mxu0 0
        %487 = vmatpush1.bf16.xpose.msra.mxu0 %v456
        %488 = vmatprep.subr.bf16.mxu0 0
        %489 = vmatpush2.bf16.xpose.msra.mxu0 0
        %490 = vmatprep.subr.bf16.mxu0 0
        %491 = vmatpush2.bf16.xpose.msra.mxu0 0
        %492 = vmatprep.subr.bf16.mxu0 0
        %493 = vmatpush2.bf16.xpose.msra.mxu0 0
        %494 = vmatprep.subr.bf16.mxu0 0
        %495 = vmatpush2.bf16.xpose.msra.mxu0 0
        %496 = vmatprep.subr.bf16.mxu0 0
        %497 = vmatpush2.bf16.xpose.msra.mxu0 0
        %498 = vmatprep.subr.bf16.mxu0 0
        %499 = vmatpush2.bf16.xpose.msra.mxu0 0
        %500 = vmatprep.subr.bf16.mxu0 0
        %501 = vmatpush2.bf16.xpose.msra.mxu0 0
        %502 = vmatprep.subr.bf16.mxu0 0
        %503 = vmatpush2.bf16.xpose.msra.mxu0 0
        %504 = vmatprep.mubr.bf16.mxu0 0
        %505 = vmatmul.mubr.bf16.gmra.mxu0 %v392
        %v506 = vpop.f32.mrf.mxu0
        %v507 = vadd.f32 0.0, %v506
        %v508 = vpop.f32.mrf.mxu0
        %v509 = vpop.f32.mrf.mxu0
        %v510 = vadd.f32 0.0, %v509
        %v511 = vpop.f32.mrf.mxu0
        %512 = vmatprep.mubr.bf16.mxu0 0
        %513 = vmatmul.mubr.bf16.gmra.mxu0 %v393
        %v514 = vpop.f32.mrf.mxu0
        %v515 = vadd.f32 0.0, %v514
        %v516 = vpop.f32.mrf.mxu0
        %v517 = vpop.f32.mrf.mxu0
        %v518 = vadd.f32 0.0, %v517
        %v519 = vpop.f32.mrf.mxu0
        %520 = vmatprep.mubr.bf16.mxu0 0
        %521 = vmatmul.mubr.bf16.gmra.mxu0 %v394
        %v522 = vpop.f32.mrf.mxu0
        %v523 = vadd.f32 0.0, %v522
        %v524 = vpop.f32.mrf.mxu0
        %v525 = vpop.f32.mrf.mxu0
        %v526 = vadd.f32 0.0, %v525
        %v527 = vpop.f32.mrf.mxu0
        %528 = vmatprep.mubr.bf16.mxu0 0
        %529 = vmatmul.mubr.bf16.gmra.mxu0 %v395
        %v530 = vpop.f32.mrf.mxu0
        %v531 = vadd.f32 0.0, %v530
        %v532 = vpop.f32.mrf.mxu0
        %v533 = vpop.f32.mrf.mxu0
        %v534 = vadd.f32 0.0, %v533
        %v535 = vpop.f32.mrf.mxu0
        %536 = vmatprep.mubr.bf16.mxu0 0
        %537 = vmatmul.mubr.bf16.gmra.mxu0 %v396
        %v538 = vpop.f32.mrf.mxu0
        %v539 = vadd.f32 0.0, %v538
        %v540 = vpop.f32.mrf.mxu0
        %v541 = vpop.f32.mrf.mxu0
        %v542 = vadd.f32 0.0, %v541
        %v543 = vpop.f32.mrf.mxu0
        %544 = vmatprep.mubr.bf16.mxu0 0
        %545 = vmatmul.mubr.bf16.gmra.mxu0 %v397
        %v546 = vpop.f32.mrf.mxu0
        %v547 = vadd.f32 0.0, %v546
        %v548 = vpop.f32.mrf.mxu0
        %v549 = vpop.f32.mrf.mxu0
        %v550 = vadd.f32 0.0, %v549
        %v551 = vpop.f32.mrf.mxu0
        %552 = vmatprep.mubr.bf16.mxu0 0
        %553 = vmatmul.mubr.bf16.gmra.mxu0 %v398
        %v554 = vpop.f32.mrf.mxu0
        %v555 = vadd.f32 0.0, %v554
        %v556 = vpop.f32.mrf.mxu0
        %v557 = vpop.f32.mrf.mxu0
        %v558 = vadd.f32 0.0, %v557
        %v559 = vpop.f32.mrf.mxu0
        %560 = vmatprep.mubr.bf16.mxu0 0
        %561 = vmatmul.mubr.bf16.gmra.mxu0 %v399
        %v562 = vpop.f32.mrf.mxu0
        %v563 = vadd.f32 0.0, %v562
        %v564 = vpop.f32.mrf.mxu0
        %v565 = vpop.f32.mrf.mxu0
        %v566 = vadd.f32 0.0, %v565
        %v567 = vpop.f32.mrf.mxu0
        %568 = vmatprep.mubr.bf16.mxu0 0
        %569 = vmatmul.mubr.bf16.gmra.mxu0 %v400
        %v570 = vpop.f32.mrf.mxu0
        %v571 = vadd.f32 0.0, %v570
        %v572 = vpop.f32.mrf.mxu0
        %v573 = vpop.f32.mrf.mxu0
        %v574 = vadd.f32 0.0, %v573
        %v575 = vpop.f32.mrf.mxu0
        %576 = vmatprep.mubr.bf16.mxu0 0
        %577 = vmatmul.mubr.bf16.gmra.mxu0 %v401
        %v578 = vpop.f32.mrf.mxu0
        %v579 = vadd.f32 0.0, %v578
        %v580 = vpop.f32.mrf.mxu0
        %v581 = vpop.f32.mrf.mxu0
        %v582 = vadd.f32 0.0, %v581
        %v583 = vpop.f32.mrf.mxu0
        %584 = vmatprep.mubr.bf16.mxu0 0
        %585 = vmatmul.mubr.bf16.gmra.mxu0 %v402
        %v586 = vpop.f32.mrf.mxu0
        %v587 = vadd.f32 0.0, %v586
        %v588 = vpop.f32.mrf.mxu0
        %v589 = vpop.f32.mrf.mxu0
        %v590 = vadd.f32 0.0, %v589
        %v591 = vpop.f32.mrf.mxu0
        %592 = vmatprep.mubr.bf16.mxu0 0
        %593 = vmatmul.mubr.bf16.gmra.mxu0 %v403
        %v594 = vpop.f32.mrf.mxu0
        %v595 = vadd.f32 0.0, %v594
        %v596 = vpop.f32.mrf.mxu0
        %v597 = vpop.f32.mrf.mxu0
        %v598 = vadd.f32 0.0, %v597
        %v599 = vpop.f32.mrf.mxu0
        %600 = vmatprep.mubr.bf16.mxu0 0
        %601 = vmatmul.mubr.bf16.gmra.mxu0 %v404
        %v602 = vpop.f32.mrf.mxu0
        %v603 = vadd.f32 0.0, %v602
        %v604 = vpop.f32.mrf.mxu0
        %v605 = vpop.f32.mrf.mxu0
        %v606 = vadd.f32 0.0, %v605
        %v607 = vpop.f32.mrf.mxu0
        %608 = vmatprep.mubr.bf16.mxu0 0
        %609 = vmatmul.mubr.bf16.gmra.mxu0 %v405
        %v610 = vpop.f32.mrf.mxu0
        %v611 = vadd.f32 0.0, %v610
        %v612 = vpop.f32.mrf.mxu0
        %v613 = vpop.f32.mrf.mxu0
        %v614 = vadd.f32 0.0, %v613
        %v615 = vpop.f32.mrf.mxu0
        %616 = vmatprep.mubr.bf16.mxu0 0
        %617 = vmatmul.mubr.bf16.gmra.mxu0 %v406
        %v618 = vpop.f32.mrf.mxu0
        %v619 = vadd.f32 0.0, %v618
        %v620 = vpop.f32.mrf.mxu0
        %v621 = vpop.f32.mrf.mxu0
        %v622 = vadd.f32 0.0, %v621
        %v623 = vpop.f32.mrf.mxu0
        %624 = vmatprep.mubr.bf16.mxu0 0
        %625 = vmatmul.mubr.bf16.gmra.mxu0 %v407
        %v626 = vpop.f32.mrf.mxu0
        %v627 = vadd.f32 0.0, %v626
        %v628 = vpop.f32.mrf.mxu0
        %v629 = vpop.f32.mrf.mxu0
        %v630 = vadd.f32 0.0, %v629
        %v631 = vpop.f32.mrf.mxu0
        %632 = vdwg.mxu0
        %v633 = vld [vmem:[#allocation7] sm:$0xf]
        %v634 = vld [vmem:[#allocation7 + $0x4] sm:$0xf]
        %v635 = vld [vmem:[#allocation7 + $0x8] sm:$0xf]
        %v636 = vld [vmem:[#allocation7 + $0xc] sm:$0xf]
        %v637 = vld [vmem:[#allocation7 + $0x10] sm:$0xf]
        %v638 = vld [vmem:[#allocation7 + $0x14] sm:$0xf]
        %v639 = vld [vmem:[#allocation7 + $0x18] sm:$0xf]
        %v640 = vld [vmem:[#allocation7 + $0x1c] sm:$0xf]
        %v641 = vld [vmem:[#allocation7 + $0x20] sm:$0xf]
        %v642 = vld [vmem:[#allocation7 + $0x24] sm:$0xf]
        %v643 = vld [vmem:[#allocation7 + $0x28] sm:$0xf]
        %v644 = vld [vmem:[#allocation7 + $0x2c] sm:$0xf]
        %v645 = vld [vmem:[#allocation7 + $0x30] sm:$0xf]
        %v646 = vld [vmem:[#allocation7 + $0x34] sm:$0xf]
        %v647 = vld [vmem:[#allocation7 + $0x38] sm:$0xf]
        %v648 = vld [vmem:[#allocation7 + $0x3c] sm:$0xf]
        %v665 = vunpack.c.l.b16 %v633
        %v666 = vunpack.c.l.b16 %v634
        %v667 = vunpack.c.l.b16 %v635
        %v668 = vunpack.c.l.b16 %v636
        %v669 = vunpack.c.l.b16 %v637
        %v670 = vunpack.c.l.b16 %v638
        %v671 = vunpack.c.l.b16 %v639
        %v672 = vunpack.c.l.b16 %v640
        %v673 = vunpack.c.l.b16 %v641
        %v674 = vunpack.c.l.b16 %v642
        %v675 = vunpack.c.l.b16 %v643
        %v676 = vunpack.c.l.b16 %v644
        %v677 = vunpack.c.l.b16 %v645
        %v678 = vunpack.c.l.b16 %v646
        %v679 = vunpack.c.l.b16 %v647
        %v680 = vunpack.c.l.b16 %v648
        %v681 = vpack.c.b16 %v666, %v665
        %v682 = vpack.c.b16 %v668, %v667
        %v683 = vpack.c.b16 %v670, %v669
        %v684 = vpack.c.b16 %v672, %v671
        %v685 = vpack.c.b16 %v674, %v673
        %v686 = vpack.c.b16 %v676, %v675
        %v687 = vpack.c.b16 %v678, %v677
        %v688 = vpack.c.b16 %v680, %v679
        %697 = vmatprep.subr.bf16.mxu0 0
        %698 = vmatpush1.bf16.xpose.msra.mxu0 %v688
        %699 = vmatprep.subr.bf16.mxu0 0
        %700 = vmatpush1.bf16.xpose.msra.mxu0 %v687
        %701 = vmatprep.subr.bf16.mxu0 0
        %702 = vmatpush1.bf16.xpose.msra.mxu0 %v686
        %703 = vmatprep.subr.bf16.mxu0 0
        %704 = vmatpush1.bf16.xpose.msra.mxu0 %v685
        %705 = vmatprep.subr.bf16.mxu0 0
        %706 = vmatpush1.bf16.xpose.msra.mxu0 %v684
        %707 = vmatprep.subr.bf16.mxu0 0
        %708 = vmatpush1.bf16.xpose.msra.mxu0 %v683
        %709 = vmatprep.subr.bf16.mxu0 0
        %710 = vmatpush1.bf16.xpose.msra.mxu0 %v682
        %711 = vmatprep.subr.bf16.mxu0 0
        %712 = vmatpush1.bf16.xpose.msra.mxu0 %v681
        %713 = vmatprep.subr.bf16.mxu0 0
        %714 = vmatpush2.bf16.xpose.msra.mxu0 0
        %715 = vmatprep.subr.bf16.mxu0 0
        %716 = vmatpush2.bf16.xpose.msra.mxu0 0
        %717 = vmatprep.subr.bf16.mxu0 0
        %718 = vmatpush2.bf16.xpose.msra.mxu0 0
        %719 = vmatprep.subr.bf16.mxu0 0
        %720 = vmatpush2.bf16.xpose.msra.mxu0 0
        %721 = vmatprep.subr.bf16.mxu0 0
        %722 = vmatpush2.bf16.xpose.msra.mxu0 0
        %723 = vmatprep.subr.bf16.mxu0 0
        %724 = vmatpush2.bf16.xpose.msra.mxu0 0
        %725 = vmatprep.subr.bf16.mxu0 0
        %726 = vmatpush2.bf16.xpose.msra.mxu0 0
        %727 = vmatprep.subr.bf16.mxu0 0
        %728 = vmatpush2.bf16.xpose.msra.mxu0 0
        %729 = vmatprep.mubr.bf16.mxu0 0
        %730 = vmatmul.mubr.bf16.gmra.mxu0 %v392
        %v731 = vpop.f32.mrf.mxu0
        %v732 = vadd.f32 0.0, %v731
        %v733 = vpop.f32.mrf.mxu0
        %v734 = vpop.f32.mrf.mxu0
        %v735 = vadd.f32 0.0, %v734
        %v736 = vpop.f32.mrf.mxu0
        %737 = vmatprep.mubr.bf16.mxu0 0
        %738 = vmatmul.mubr.bf16.gmra.mxu0 %v393
        %v739 = vpop.f32.mrf.mxu0
        %v740 = vadd.f32 0.0, %v739
        %v741 = vpop.f32.mrf.mxu0
        %v742 = vpop.f32.mrf.mxu0
        %v743 = vadd.f32 0.0, %v742
        %v744 = vpop.f32.mrf.mxu0
        %745 = vmatprep.mubr.bf16.mxu0 0
        %746 = vmatmul.mubr.bf16.gmra.mxu0 %v394
        %v747 = vpop.f32.mrf.mxu0
        %v748 = vadd.f32 0.0, %v747
        %v749 = vpop.f32.mrf.mxu0
        %v750 = vpop.f32.mrf.mxu0
        %v751 = vadd.f32 0.0, %v750
        %v752 = vpop.f32.mrf.mxu0
        %753 = vmatprep.mubr.bf16.mxu0 0
        %754 = vmatmul.mubr.bf16.gmra.mxu0 %v395
        %v755 = vpop.f32.mrf.mxu0
        %v756 = vadd.f32 0.0, %v755
        %v757 = vpop.f32.mrf.mxu0
        %v758 = vpop.f32.mrf.mxu0
        %v759 = vadd.f32 0.0, %v758
        %v760 = vpop.f32.mrf.mxu0
        %761 = vmatprep.mubr.bf16.mxu0 0
        %762 = vmatmul.mubr.bf16.gmra.mxu0 %v396
        %v763 = vpop.f32.mrf.mxu0
        %v764 = vadd.f32 0.0, %v763
        %v765 = vpop.f32.mrf.mxu0
        %v766 = vpop.f32.mrf.mxu0
        %v767 = vadd.f32 0.0, %v766
        %v768 = vpop.f32.mrf.mxu0
        %769 = vmatprep.mubr.bf16.mxu0 0
        %770 = vmatmul.mubr.bf16.gmra.mxu0 %v397
        %v771 = vpop.f32.mrf.mxu0
        %v772 = vadd.f32 0.0, %v771
        %v773 = vpop.f32.mrf.mxu0
        %v774 = vpop.f32.mrf.mxu0
        %v775 = vadd.f32 0.0, %v774
        %v776 = vpop.f32.mrf.mxu0
        %777 = vmatprep.mubr.bf16.mxu0 0
        %778 = vmatmul.mubr.bf16.gmra.mxu0 %v398
        %v779 = vpop.f32.mrf.mxu0
        %v780 = vadd.f32 0.0, %v779
        %v781 = vpop.f32.mrf.mxu0
        %v782 = vpop.f32.mrf.mxu0
        %v783 = vadd.f32 0.0, %v782
        %v784 = vpop.f32.mrf.mxu0
        %785 = vmatprep.mubr.bf16.mxu0 0
        %786 = vmatmul.mubr.bf16.gmra.mxu0 %v399
        %v787 = vpop.f32.mrf.mxu0
        %v788 = vadd.f32 0.0, %v787
        %v789 = vpop.f32.mrf.mxu0
        %v790 = vpop.f32.mrf.mxu0
        %v791 = vadd.f32 0.0, %v790
        %v792 = vpop.f32.mrf.mxu0
        %793 = vmatprep.mubr.bf16.mxu0 0
        %794 = vmatmul.mubr.bf16.gmra.mxu0 %v400
        %v795 = vpop.f32.mrf.mxu0
        %v796 = vadd.f32 0.0, %v795
        %v797 = vpop.f32.mrf.mxu0
        %v798 = vpop.f32.mrf.mxu0
        %v799 = vadd.f32 0.0, %v798
        %v800 = vpop.f32.mrf.mxu0
        %801 = vmatprep.mubr.bf16.mxu0 0
        %802 = vmatmul.mubr.bf16.gmra.mxu0 %v401
        %v803 = vpop.f32.mrf.mxu0
        %v804 = vadd.f32 0.0, %v803
        %v805 = vpop.f32.mrf.mxu0
        %v806 = vpop.f32.mrf.mxu0
        %v807 = vadd.f32 0.0, %v806
        %v808 = vpop.f32.mrf.mxu0
        %809 = vmatprep.mubr.bf16.mxu0 0
        %810 = vmatmul.mubr.bf16.gmra.mxu0 %v402
        %v811 = vpop.f32.mrf.mxu0
        %v812 = vadd.f32 0.0, %v811
        %v813 = vpop.f32.mrf.mxu0
        %v814 = vpop.f32.mrf.mxu0
        %v815 = vadd.f32 0.0, %v814
        %v816 = vpop.f32.mrf.mxu0
        %817 = vmatprep.mubr.bf16.mxu0 0
        %818 = vmatmul.mubr.bf16.gmra.mxu0 %v403
        %v819 = vpop.f32.mrf.mxu0
        %v820 = vadd.f32 0.0, %v819
        %v821 = vpop.f32.mrf.mxu0
        %v822 = vpop.f32.mrf.mxu0
        %v823 = vadd.f32 0.0, %v822
        %v824 = vpop.f32.mrf.mxu0
        %825 = vmatprep.mubr.bf16.mxu0 0
        %826 = vmatmul.mubr.bf16.gmra.mxu0 %v404
        %v827 = vpop.f32.mrf.mxu0
        %v828 = vadd.f32 0.0, %v827
        %v829 = vpop.f32.mrf.mxu0
        %v830 = vpop.f32.mrf.mxu0
        %v831 = vadd.f32 0.0, %v830
        %v832 = vpop.f32.mrf.mxu0
        %833 = vmatprep.mubr.bf16.mxu0 0
        %834 = vmatmul.mubr.bf16.gmra.mxu0 %v405
        %v835 = vpop.f32.mrf.mxu0
        %v836 = vadd.f32 0.0, %v835
        %v837 = vpop.f32.mrf.mxu0
        %v838 = vpop.f32.mrf.mxu0
        %v839 = vadd.f32 0.0, %v838
        %v840 = vpop.f32.mrf.mxu0
        %841 = vmatprep.mubr.bf16.mxu0 0
        %842 = vmatmul.mubr.bf16.gmra.mxu0 %v406
        %v843 = vpop.f32.mrf.mxu0
        %v844 = vadd.f32 0.0, %v843
        %v845 = vpop.f32.mrf.mxu0
        %v846 = vpop.f32.mrf.mxu0
        %v847 = vadd.f32 0.0, %v846
        %v848 = vpop.f32.mrf.mxu0
        %849 = vmatprep.mubr.bf16.mxu0 0
        %850 = vmatmul.mubr.bf16.gmra.mxu0 %v407
        %v851 = vpop.f32.mrf.mxu0
        %v852 = vadd.f32 0.0, %v851
        %v853 = vpop.f32.mrf.mxu0
        %v854 = vpop.f32.mrf.mxu0
        %v855 = vadd.f32 0.0, %v854
        %v856 = vpop.f32.mrf.mxu0
        %857 = vdwg.mxu0
        %v858 = vmul.f32 %v507, 0.088388346
        %v859 = vmul.f32 %v510, 0.088388346
        %v860 = vmul.f32 %v515, 0.088388346
        %v861 = vmul.f32 %v518, 0.088388346
        %v862 = vmul.f32 %v523, 0.088388346
        %v863 = vmul.f32 %v526, 0.088388346
        %v864 = vmul.f32 %v531, 0.088388346
        %v865 = vmul.f32 %v534, 0.088388346
        %v866 = vmul.f32 %v539, 0.088388346
        %v867 = vmul.f32 %v542, 0.088388346
        %v868 = vmul.f32 %v547, 0.088388346
        %v869 = vmul.f32 %v550, 0.088388346
        %v870 = vmul.f32 %v555, 0.088388346
        %v871 = vmul.f32 %v558, 0.088388346
        %v872 = vmul.f32 %v563, 0.088388346
        %v873 = vmul.f32 %v566, 0.088388346
        %v874 = vmul.f32 %v571, 0.088388346
        %v875 = vmul.f32 %v574, 0.088388346
        %v876 = vmul.f32 %v579, 0.088388346
        %v877 = vmul.f32 %v582, 0.088388346
        %v878 = vmul.f32 %v587, 0.088388346
        %v879 = vmul.f32 %v590, 0.088388346
        %v880 = vmul.f32 %v595, 0.088388346
        %v881 = vmul.f32 %v598, 0.088388346
        %v882 = vmul.f32 %v603, 0.088388346
        %v883 = vmul.f32 %v606, 0.088388346
        %v884 = vmul.f32 %v611, 0.088388346
        %v885 = vmul.f32 %v614, 0.088388346
        %v886 = vmul.f32 %v619, 0.088388346
        %v887 = vmul.f32 %v622, 0.088388346
        %v888 = vmul.f32 %v627, 0.088388346
        %v889 = vmul.f32 %v630, 0.088388346
        %v890 = vpack.c.bf16 %v859, %v858
        %v891 = vpack.c.bf16 %v861, %v860
        %v892 = vpack.c.bf16 %v863, %v862
        %v893 = vpack.c.bf16 %v865, %v864
        %v894 = vpack.c.bf16 %v867, %v866
        %v895 = vpack.c.bf16 %v869, %v868
        %v896 = vpack.c.bf16 %v871, %v870
        %v897 = vpack.c.bf16 %v873, %v872
        %v898 = vpack.c.bf16 %v875, %v874
        %v899 = vpack.c.bf16 %v877, %v876
        %v900 = vpack.c.bf16 %v879, %v878
        %v901 = vpack.c.bf16 %v881, %v880
        %v902 = vpack.c.bf16 %v883, %v882
        %v903 = vpack.c.bf16 %v885, %v884
        %v904 = vpack.c.bf16 %v887, %v886
        %v905 = vpack.c.bf16 %v889, %v888
        %v922 = vunpack.c.l.b16 %v890
        %v923 = vunpack.c.h.b16 %v890
        %v924 = vunpack.c.l.b16 %v891
        %v925 = vunpack.c.h.b16 %v891
        %v926 = vunpack.c.l.b16 %v892
        %v927 = vunpack.c.h.b16 %v892
        %v928 = vunpack.c.l.b16 %v893
        %v929 = vunpack.c.h.b16 %v893
        %v930 = vunpack.c.l.b16 %v894
        %v931 = vunpack.c.h.b16 %v894
        %v932 = vunpack.c.l.b16 %v895
        %v933 = vunpack.c.h.b16 %v895
        %v934 = vunpack.c.l.b16 %v896
        %v935 = vunpack.c.h.b16 %v896
        %v936 = vunpack.c.l.b16 %v897
        %v937 = vunpack.c.h.b16 %v897
        %v938 = vunpack.c.l.b16 %v898
        %v939 = vunpack.c.h.b16 %v898
        %v940 = vunpack.c.l.b16 %v899
        %v941 = vunpack.c.h.b16 %v899
        %v942 = vunpack.c.l.b16 %v900
        %v943 = vunpack.c.h.b16 %v900
        %v944 = vunpack.c.l.b16 %v901
        %v945 = vunpack.c.h.b16 %v901
        %v946 = vunpack.c.l.b16 %v902
        %v947 = vunpack.c.h.b16 %v902
        %v948 = vunpack.c.l.b16 %v903
        %v949 = vunpack.c.h.b16 %v903
        %v950 = vunpack.c.l.b16 %v904
        %v951 = vunpack.c.h.b16 %v904
        %v952 = vunpack.c.l.b16 %v905
        %v953 = vunpack.c.h.b16 %v905
        %v954 = vpack.c.b16 %v922, %v922
        %v955 = vpack.c.b16 %v923, %v923
        %v956 = vpack.c.b16 %v924, %v924
        %v957 = vpack.c.b16 %v925, %v925
        %v958 = vpack.c.b16 %v926, %v926
        %v959 = vpack.c.b16 %v927, %v927
        %v960 = vpack.c.b16 %v928, %v928
        %v961 = vpack.c.b16 %v929, %v929
        %v962 = vpack.c.b16 %v930, %v930
        %v963 = vpack.c.b16 %v931, %v931
        %v964 = vpack.c.b16 %v932, %v932
        %v965 = vpack.c.b16 %v933, %v933
        %v966 = vpack.c.b16 %v934, %v934
        %v967 = vpack.c.b16 %v935, %v935
        %v968 = vpack.c.b16 %v936, %v936
        %v969 = vpack.c.b16 %v937, %v937
        %v970 = vpack.c.b16 %v938, %v938
        %v971 = vpack.c.b16 %v939, %v939
        %v972 = vpack.c.b16 %v940, %v940
        %v973 = vpack.c.b16 %v941, %v941
        %v974 = vpack.c.b16 %v942, %v942
        %v975 = vpack.c.b16 %v943, %v943
        %v976 = vpack.c.b16 %v944, %v944
        %v977 = vpack.c.b16 %v945, %v945
        %v978 = vpack.c.b16 %v946, %v946
        %v979 = vpack.c.b16 %v947, %v947
        %v980 = vpack.c.b16 %v948, %v948
        %v981 = vpack.c.b16 %v949, %v949
        %v982 = vpack.c.b16 %v950, %v950
        %v983 = vpack.c.b16 %v951, %v951
        %v984 = vpack.c.b16 %v952, %v952
        %v985 = vpack.c.b16 %v953, %v953
        %1018 = vst [vmem:[%s268] sm:$0xf] %v954
        %1019 = vst [vmem:[%s268 + $0x4] sm:$0xf] %v955
        %1020 = vst [vmem:[%s268 + $0x8] sm:$0xf] %v956
        %1021 = vst [vmem:[%s268 + $0xc] sm:$0xf] %v957
        %1022 = vst [vmem:[%s268 + $0x10] sm:$0xf] %v958
        %1023 = vst [vmem:[%s268 + $0x14] sm:$0xf] %v959
        %1024 = vst [vmem:[%s268 + $0x18] sm:$0xf] %v960
        %1025 = vst [vmem:[%s268 + $0x1c] sm:$0xf] %v961
        %1026 = vst [vmem:[%s268 + $0x20] sm:$0xf] %v962
        %1027 = vst [vmem:[%s268 + $0x24] sm:$0xf] %v963
        %1028 = vst [vmem:[%s268 + $0x28] sm:$0xf] %v964
        %1029 = vst [vmem:[%s268 + $0x2c] sm:$0xf] %v965
        %1030 = vst [vmem:[%s268 + $0x30] sm:$0xf] %v966
        %1031 = vst [vmem:[%s268 + $0x34] sm:$0xf] %v967
        %1032 = vst [vmem:[%s268 + $0x38] sm:$0xf] %v968
        %1033 = vst [vmem:[%s268 + $0x3c] sm:$0xf] %v969
        %1034 = vst [vmem:[%s268 + $0x40] sm:$0xf] %v970
        %1035 = vst [vmem:[%s268 + $0x44] sm:$0xf] %v971
        %1036 = vst [vmem:[%s268 + $0x48] sm:$0xf] %v972
        %1037 = vst [vmem:[%s268 + $0x4c] sm:$0xf] %v973
        %1038 = vst [vmem:[%s268 + $0x50] sm:$0xf] %v974
        %1039 = vst [vmem:[%s268 + $0x54] sm:$0xf] %v975
        %1040 = vst [vmem:[%s268 + $0x58] sm:$0xf] %v976
        %1041 = vst [vmem:[%s268 + $0x5c] sm:$0xf] %v977
        %1042 = vst [vmem:[%s268 + $0x60] sm:$0xf] %v978
        %1043 = vst [vmem:[%s268 + $0x64] sm:$0xf] %v979
        %1044 = vst [vmem:[%s268 + $0x68] sm:$0xf] %v980
        %1045 = vst [vmem:[%s268 + $0x6c] sm:$0xf] %v981
        %1046 = vst [vmem:[%s268 + $0x70] sm:$0xf] %v982
        %1047 = vst [vmem:[%s268 + $0x74] sm:$0xf] %v983
        %1048 = vst [vmem:[%s268 + $0x78] sm:$0xf] %v984
        %1049 = vst [vmem:[%s268 + $0x7c] sm:$0xf] %v985
        %v1050 = vpack.c.bf16 %v735, %v732
        %v1051 = vpack.c.bf16 %v743, %v740
        %v1052 = vpack.c.bf16 %v751, %v748
        %v1053 = vpack.c.bf16 %v759, %v756
        %v1054 = vpack.c.bf16 %v767, %v764
        %v1055 = vpack.c.bf16 %v775, %v772
        %v1056 = vpack.c.bf16 %v783, %v780
        %v1057 = vpack.c.bf16 %v791, %v788
        %v1058 = vpack.c.bf16 %v799, %v796
        %v1059 = vpack.c.bf16 %v807, %v804
        %v1060 = vpack.c.bf16 %v815, %v812
        %v1061 = vpack.c.bf16 %v823, %v820
        %v1062 = vpack.c.bf16 %v831, %v828
        %v1063 = vpack.c.bf16 %v839, %v836
        %v1064 = vpack.c.bf16 %v847, %v844
        %v1065 = vpack.c.bf16 %v855, %v852
        %v1082 = vunpack.c.l.b16 %v1050
        %v1083 = vunpack.c.h.b16 %v1050
        %v1084 = vunpack.c.l.b16 %v1051
        %v1085 = vunpack.c.h.b16 %v1051
        %v1086 = vunpack.c.l.b16 %v1052
        %v1087 = vunpack.c.h.b16 %v1052
        %v1088 = vunpack.c.l.b16 %v1053
        %v1089 = vunpack.c.h.b16 %v1053
        %v1090 = vunpack.c.l.b16 %v1054
        %v1091 = vunpack.c.h.b16 %v1054
        %v1092 = vunpack.c.l.b16 %v1055
        %v1093 = vunpack.c.h.b16 %v1055
        %v1094 = vunpack.c.l.b16 %v1056
        %v1095 = vunpack.c.h.b16 %v1056
        %v1096 = vunpack.c.l.b16 %v1057
        %v1097 = vunpack.c.h.b16 %v1057
        %v1098 = vunpack.c.l.b16 %v1058
        %v1099 = vunpack.c.h.b16 %v1058
        %v1100 = vunpack.c.l.b16 %v1059
        %v1101 = vunpack.c.h.b16 %v1059
        %v1102 = vunpack.c.l.b16 %v1060
        %v1103 = vunpack.c.h.b16 %v1060
        %v1104 = vunpack.c.l.b16 %v1061
        %v1105 = vunpack.c.h.b16 %v1061
        %v1106 = vunpack.c.l.b16 %v1062
        %v1107 = vunpack.c.h.b16 %v1062
        %v1108 = vunpack.c.l.b16 %v1063
        %v1109 = vunpack.c.h.b16 %v1063
        %v1110 = vunpack.c.l.b16 %v1064
        %v1111 = vunpack.c.h.b16 %v1064
        %v1112 = vunpack.c.l.b16 %v1065
        %v1113 = vunpack.c.h.b16 %v1065
        %v1114 = vpack.c.b16 %v1082, %v1082
        %v1115 = vpack.c.b16 %v1083, %v1083
        %v1116 = vpack.c.b16 %v1084, %v1084
        %v1117 = vpack.c.b16 %v1085, %v1085
        %v1118 = vpack.c.b16 %v1086, %v1086
        %v1119 = vpack.c.b16 %v1087, %v1087
        %v1120 = vpack.c.b16 %v1088, %v1088
        %v1121 = vpack.c.b16 %v1089, %v1089
        %v1122 = vpack.c.b16 %v1090, %v1090
        %v1123 = vpack.c.b16 %v1091, %v1091
        %v1124 = vpack.c.b16 %v1092, %v1092
        %v1125 = vpack.c.b16 %v1093, %v1093
        %v1126 = vpack.c.b16 %v1094, %v1094
        %v1127 = vpack.c.b16 %v1095, %v1095
        %v1128 = vpack.c.b16 %v1096, %v1096
        %v1129 = vpack.c.b16 %v1097, %v1097
        %v1130 = vpack.c.b16 %v1098, %v1098
        %v1131 = vpack.c.b16 %v1099, %v1099
        %v1132 = vpack.c.b16 %v1100, %v1100
        %v1133 = vpack.c.b16 %v1101, %v1101
        %v1134 = vpack.c.b16 %v1102, %v1102
        %v1135 = vpack.c.b16 %v1103, %v1103
        %v1136 = vpack.c.b16 %v1104, %v1104
        %v1137 = vpack.c.b16 %v1105, %v1105
        %v1138 = vpack.c.b16 %v1106, %v1106
        %v1139 = vpack.c.b16 %v1107, %v1107
        %v1140 = vpack.c.b16 %v1108, %v1108
        %v1141 = vpack.c.b16 %v1109, %v1109
        %v1142 = vpack.c.b16 %v1110, %v1110
        %v1143 = vpack.c.b16 %v1111, %v1111
        %v1144 = vpack.c.b16 %v1112, %v1112
        %v1145 = vpack.c.b16 %v1113, %v1113
        %1178 = vst [vmem:[%s275] sm:$0xf] %v1114
        %1179 = vst [vmem:[%s275 + $0x4] sm:$0xf] %v1115
        %1180 = vst [vmem:[%s275 + $0x8] sm:$0xf] %v1116
        %1181 = vst [vmem:[%s275 + $0xc] sm:$0xf] %v1117
        %1182 = vst [vmem:[%s275 + $0x10] sm:$0xf] %v1118
        %1183 = vst [vmem:[%s275 + $0x14] sm:$0xf] %v1119
        %1184 = vst [vmem:[%s275 + $0x18] sm:$0xf] %v1120
        %1185 = vst [vmem:[%s275 + $0x1c] sm:$0xf] %v1121
        %1186 = vst [vmem:[%s275 + $0x20] sm:$0xf] %v1122
        %1187 = vst [vmem:[%s275 + $0x24] sm:$0xf] %v1123
        %1188 = vst [vmem:[%s275 + $0x28] sm:$0xf] %v1124
        %1189 = vst [vmem:[%s275 + $0x2c] sm:$0xf] %v1125
        %1190 = vst [vmem:[%s275 + $0x30] sm:$0xf] %v1126
        %1191 = vst [vmem:[%s275 + $0x34] sm:$0xf] %v1127
        %1192 = vst [vmem:[%s275 + $0x38] sm:$0xf] %v1128
        %1193 = vst [vmem:[%s275 + $0x3c] sm:$0xf] %v1129
        %1194 = vst [vmem:[%s275 + $0x40] sm:$0xf] %v1130
        %1195 = vst [vmem:[%s275 + $0x44] sm:$0xf] %v1131
        %1196 = vst [vmem:[%s275 + $0x48] sm:$0xf] %v1132
        %1197 = vst [vmem:[%s275 + $0x4c] sm:$0xf] %v1133
        %1198 = vst [vmem:[%s275 + $0x50] sm:$0xf] %v1134
        %1199 = vst [vmem:[%s275 + $0x54] sm:$0xf] %v1135
        %1200 = vst [vmem:[%s275 + $0x58] sm:$0xf] %v1136
        %1201 = vst [vmem:[%s275 + $0x5c] sm:$0xf] %v1137
        %1202 = vst [vmem:[%s275 + $0x60] sm:$0xf] %v1138
        %1203 = vst [vmem:[%s275 + $0x64] sm:$0xf] %v1139
        %1204 = vst [vmem:[%s275 + $0x68] sm:$0xf] %v1140
        %1205 = vst [vmem:[%s275 + $0x6c] sm:$0xf] %v1141
        %1206 = vst [vmem:[%s275 + $0x70] sm:$0xf] %v1142
        %1207 = vst [vmem:[%s275 + $0x74] sm:$0xf] %v1143
        %1208 = vst [vmem:[%s275 + $0x78] sm:$0xf] %v1144
        %1209 = vst [vmem:[%s275 + $0x7c] sm:$0xf] %v1145
        %s1210 = sand.u32 %s118, 1
        %s1211 = scalar_lea.sflag [#allocation4], %s1210
        %s1212 = sand.u32 %s118, 1
        %s1213 = smul.addr %s1212, 128
        %s1214 = scalar_lea.vmem [#allocation8], %s1213
        %s1215 = sand.u32 %s146, 1
        %s1216 = scalar_lea.sflag [#allocation10], %s1215
        %s1217 = sand.u32 %s146, 1
        %s1218 = smul.addr %s1217, 128
        %s1219 = scalar_lea.vmem [#allocation9], %s1218
        // Predicated region
        $region45: #{tpu_custom_call.1} parent=31 // pred_check
          %p1220 = pneg %p128
        $region46: #{tpu_custom_call.1} parent=31 // pred_check_branch
          %1222 = sbr.rel (%p1220) target = $region48
        $region47: #{tpu_custom_call.1} parent=31 // pred_region
          %s1223 = smul.u32 32, %s31
          %s1225 = ssub.s32 2048, 2048
          %1226 = vsyncadd %s1211, %s1225
          %s1227 = smul.addr %s30, 32
          %s1228 = sadd.s32 %s1223, %s1227
          %s1229 = smul.addr %s1228, 64
          %s1230 = scalar_lea.hbm %s3, %s1229
          %s1231 = sshll.u32 %s1214, 4
          %s1232 = int_to_ptr.vmem [resolvable:$true] %s1231
          %1237 = dma.vmem_to_hbm [thread:$0]  %s1232, 2048, %s1230, %s1211, 64, 64, 4
        $region48: #{tpu_custom_call.1} parent=31 // pred_fallthru
          _
        // Predicated region
        $region49: #{tpu_custom_call.1} parent=31 // pred_check
          %p1238 = pneg %p156
        $region50: #{tpu_custom_call.1} parent=31 // pred_check_branch
          %1240 = sbr.rel (%p1238) target = $region52
        $region51: #{tpu_custom_call.1} parent=31 // pred_region
          %s1241 = smul.u32 32, %s31
          %s1243 = ssub.s32 2048, 2048
          %1244 = vsyncadd %s1216, %s1243
          %s1245 = smul.addr %s30, 32
          %s1246 = sadd.s32 %s1241, %s1245
          %s1247 = smul.addr %s1246, 64
          %s1248 = scalar_lea.hbm %s4, %s1247
          %s1249 = sshll.u32 %s1219, 4
          %s1250 = int_to_ptr.vmem [resolvable:$true] %s1249
          %1255 = dma.vmem_to_hbm [thread:$0]  %s1250, 2048, %s1248, %s1216, 64, 64, 4
        $region52: #{tpu_custom_call.1} parent=31 // pred_fallthru
          _
      $region32: #{tpu_custom_call.1} parent=5 // pred_fallthru
        _
      %p1256 = scmp.le.s32.totalorder 2, %s21
      // Predicated region
      $region53: #{tpu_custom_call.1} parent=5 // pred_check
        %p1257 = pneg %p1256
      $region54: #{tpu_custom_call.1} parent=5 // pred_check_branch
        %1259 = sbr.rel (%p1257) target = $region56
      $region55: #{tpu_custom_call.1} parent=5 // pred_region
        %s1260 = ssub.s32 %s21, 2
        // Predicated region
        $region57: #{tpu_custom_call.1} parent=55 // pred_check
          %p1261 = pneg %p134
        $region58: #{tpu_custom_call.1} parent=55 // pred_check_branch
          %1263 = sbr.rel (%p1261) target = $region60
        $region59: #{tpu_custom_call.1} parent=55 // pred_region
          %s1264 = sand.u32 %s119, 1
          %s1265 = scalar_lea.sflag [#allocation4], %s1264
          %s1266 = sand.u32 %s119, 1
          %s1267 = smul.addr %s1266, 128
          %s1268 = scalar_lea.vmem [#allocation8], %s1267
          %1269 = dma.done %s1265, 2048
        $region60: #{tpu_custom_call.1} parent=55 // pred_fallthru
          _
        // Predicated region
        $region61: #{tpu_custom_call.1} parent=55 // pred_check
          %p1270 = pneg %p162
        $region62: #{tpu_custom_call.1} parent=55 // pred_check_branch
          %1272 = sbr.rel (%p1270) target = $region64
        $region63: #{tpu_custom_call.1} parent=55 // pred_region
          %s1273 = sand.u32 %s147, 1
          %s1274 = scalar_lea.sflag [#allocation10], %s1273
          %s1275 = sand.u32 %s147, 1
          %s1276 = smul.addr %s1275, 128
          %s1277 = scalar_lea.vmem [#allocation9], %s1276
          %1278 = dma.done %s1274, 2048
        $region64: #{tpu_custom_call.1} parent=55 // pred_fallthru
          _
      $region56: #{tpu_custom_call.1} parent=5 // pred_fallthru
        _
    $region6: #{tpu_custom_call.1} parent=1 // loop_footer
      %s25 = sadd.s32 1, %s21
    $region7: #{tpu_custom_call.1} parent=1 // loop_footer_branch
      %20 = sbr.rel target = $region3
    $region8: #{tpu_custom_call.1} parent=1 // loop_exit
      _
    %1279 = vsyncpa [#allocation3], 1
    %s1280 = scalar_lea.sflag [#allocation3], 1
    %1281 = vsyncpa %s1280, 1
    %1282 = vsyncpa [#allocation6], 1
    %1283 = vsyncpa [#allocation4], 1
    %s1284 = scalar_lea.sflag [#allocation4], 1
    %1285 = vsyncpa %s1284, 1
    %1286 = vsyncpa [#allocation10], 1
    %s1287 = scalar_lea.sflag [#allocation10], 1
    %1288 = vsyncpa %s1287, 1

</llo_original>
